<compile_context>
chip_gen: v7x
topology: tpu7x:2x2x1
jax: 0.10.0
libtpu: 0.0.40
codegen_flags: <defaults>
</compile_context>

<pallas_src>
import functools

import jax
import jax.numpy as jnp
from jax.experimental import pallas as pl
from jax.experimental.pallas import tpu as pltpu


# ----------------------------------------------------------------------------
# VMEM budgeting helpers.
# ----------------------------------------------------------------------------
def _vmem_capacity_bytes():
    """Physical VMEM per TensorCore; conservative 64 MiB (v7x) fallback."""
    try:
        info = pltpu.get_tpu_info()
        cap = getattr(info, "vmem_capacity_bytes", None)
        if cap:
            return int(cap)
    except Exception:
        pass
    return 64 * 1024 * 1024


def _pick_stream_tiles(n_rows, total_t, itemsize, target_bytes):
    """Pick (row_block, t_tile) so each block is ~target_bytes and (8,128)-legal."""
    max_rb = 256                                  # multiple of 8
    rb = n_rows if n_rows <= max_rb else max_rb   # full extent or multiple of 8
    tt = (max(1, target_bytes // (rb * itemsize)) // 128) * 128
    tt = max(128, tt)
    if total_t <= tt:
        tt = total_t                              # full extent is always legal
    return rb, tt


# ----------------------------------------------------------------------------
# Fused single-pass kernel: one batch row per grid step (2x HBM traffic).
# ----------------------------------------------------------------------------
def _fms_fused_kernel(x_ref, w_ref, b_ref, o_ref):
    # x_ref: (C, T) native dtype (batch dim squeezed by BlockSpec)
    # w_ref: (C, C) PyTorch nn.Linear layout (out_features, in_features)
    # b_ref: (C, 1) bias column
    x = x_ref[...]
    t = x.shape[-1]

    # f32 accumulation of the row mean without materializing a widened copy of x.
    mean = jnp.sum(x, axis=-1, keepdims=True, dtype=jnp.float32) * (1.0 / t)

    # Linear in stored layout: y_j = sum_i W[j, i] * mean_i  == Linear(mean).
    y = jnp.dot(w_ref[...].astype(jnp.float32), mean,
                preferred_element_type=jnp.float32)
    y = y + b_ref[...].astype(jnp.float32)
    s = jax.nn.sigmoid(y).astype(x.dtype)         # (C, 1), EUP sigmoid

    # Broadcast scale-and-shift over time (one mul + one add on the VPU).
    o_ref[...] = x * s + s


def _fms_fused(x, weight, bias, *, vmem_limit):
    B, C, T = x.shape
    bias_col = bias.reshape(C, 1)
    isz = x.dtype.itemsize
    cost = pl.CostEstimate(
        flops=int(2 * B * C * C + 3 * B * C * T),
        transcendentals=int(B * C),
        bytes_accessed=int(2 * B * C * T * isz
                           + weight.size * weight.dtype.itemsize
                           + bias.size * bias.dtype.itemsize),
    )
    return pl.pallas_call(
        _fms_fused_kernel,
        out_shape=jax.ShapeDtypeStruct((B, C, T), x.dtype),
        grid=(B,),
        in_specs=[
            pl.BlockSpec((None, C, T), lambda b: (b, 0, 0)),
            pl.BlockSpec((C, C), lambda b: (0, 0)),
            pl.BlockSpec((C, 1), lambda b: (0, 0)),
        ],
        out_specs=pl.BlockSpec((None, C, T), lambda b: (b, 0, 0)),
        compiler_params=pltpu.CompilerParams(
            dimension_semantics=("parallel",),
            vmem_limit_bytes=int(vmem_limit)),
        cost_estimate=cost,
    )(x, weight, bias_col)


# ----------------------------------------------------------------------------
# Streaming two-pass path: (B*C, T) layout, byte-driven tiles.
# ----------------------------------------------------------------------------
def _fms_sum_kernel(x_ref, sum_ref, *, total_t, mask_tail):
    # Pass 1: accumulate row sums over T directly into the resident output block.
    ti = pl.program_id(1)

    @pl.when(ti == 0)
    def _():
        sum_ref[...] = jnp.zeros_like(sum_ref)

    x = x_ref[...]                                 # (rb, tt) native dtype
    rb, tt = x.shape
    if mask_tail:                                  # static: only when T % tt != 0
        col = ti * tt + jax.lax.broadcasted_iota(jnp.int32, (rb, tt), 1)
        x = jnp.where(col < total_t, x, jnp.zeros_like(x))
    sum_ref[...] += jnp.sum(x, axis=-1, keepdims=True, dtype=jnp.float32)


def _fms_apply_kernel(x_ref, s_ref, o_ref):
    # Pass 2: streaming elementwise x * s + s in native dtype.
    x = x_ref[...]                                 # (rb, tt)
    s = s_ref[...].astype(x.dtype)                 # (rb, 1)
    o_ref[...] = x * s + s


def _fms_two_pass(x, weight, bias, *, target_tile_bytes, vmem_limit):
    B, C, T = x.shape
    R = B * C
    isz = x.dtype.itemsize
    xf = x.reshape(R, T)                           # free: contiguous in HBM

    rb, tt = _pick_stream_tiles(R, T, isz, target_tile_bytes)
    nR = pl.cdiv(R, rb)
    nT = pl.cdiv(T, tt)
    mask_tail = (T % tt) != 0

    sum_cost = pl.CostEstimate(
        flops=int(R * T),
        transcendentals=0,
        bytes_accessed=int(R * T * isz + R * 4),
    )
    sums = pl.pallas_call(
        functools.partial(_fms_sum_kernel, total_t=T, mask_tail=mask_tail),
        out_shape=jax.ShapeDtypeStruct((R, 1), jnp.float32),
        grid=(nR, nT),
        in_specs=[pl.BlockSpec((rb, tt), lambda r, t: (r, t))],
        out_specs=pl.BlockSpec((rb, 1), lambda r, t: (r, 0)),
        compiler_params=pltpu.CompilerParams(
            dimension_semantics=("parallel", "arbitrary"),
            vmem_limit_bytes=int(vmem_limit)),
        cost_estimate=sum_cost,
    )(xf)

    # Tiny (B, C) x (C, C) linear + sigmoid as one well-shaped batched matmul in
    # XLA; keeps W/bias out of the streaming kernels' VMEM budget.
    mean = sums.reshape(B, C) * (1.0 / T)          # true-T divisor
    s = jax.nn.sigmoid(mean @ weight.astype(jnp.float32).T
                       + bias.astype(jnp.float32))
    s_col = s.reshape(R, 1)                        # f32, cast inside the kernel

    apply_cost = pl.CostEstimate(
        flops=int(2 * R * T),
        transcendentals=0,
        bytes_accessed=int(2 * R * T * isz + R * 4),
    )
    out = pl.pallas_call(
        _fms_apply_kernel,
        out_shape=jax.ShapeDtypeStruct((R, T), x.dtype),
        grid=(nR, nT),
        in_specs=[
            pl.BlockSpec((rb, tt), lambda r, t: (r, t)),
            pl.BlockSpec((rb, 1), lambda r, t: (r, 0)),
        ],
        out_specs=pl.BlockSpec((rb, tt), lambda r, t: (r, t)),
        compiler_params=pltpu.CompilerParams(
            dimension_semantics=("parallel", "parallel"),
            vmem_limit_bytes=int(vmem_limit)),
        cost_estimate=apply_cost,
    )(xf, s_col)
    return out.reshape(B, C, T)


# ----------------------------------------------------------------------------
# Public wrapper: picks fused vs streaming structure from a VMEM-aware budget.
# ----------------------------------------------------------------------------
def fms(x, weight, bias, *, target_tile_bytes=4 * 1024 * 1024,
        force_two_pass=False):
    """x: (B, C, T); weight: (C, C) nn.Linear layout; bias: (C,) -> (B, C, T)."""
    B, C, T = x.shape
    isz = x.dtype.itemsize

    cap = _vmem_capacity_bytes()                   # 128 MiB v5e/v6e, 64 MiB v7x
    usable = int(cap * 3 // 4)                     # ~96 MiB / ~48 MiB headroomed

    # Fused footprint: double-buffered x row + out row, resident W/bias (double
    # buffered), plus an f32-widened temp for sub-32-bit inputs, plus slack.
    row_bytes = C * T * isz
    param_bytes = (weight.size * weight.dtype.itemsize
                   + bias.size * bias.dtype.itemsize)
    widen = row_bytes * max(0, 4 // isz - 1)
    fused_footprint = 4 * row_bytes + widen + 2 * param_bytes + (1 << 20)

    # Note: on v7x with B == 1 the fused grid=(B,) leaves one TensorCore idle;
    # the streaming path below parallelizes across B*C rows and T tiles instead.
    if not force_two_pass and fused_footprint <= usable:
        return _fms_fused(x, weight, bias, vmem_limit=usable)

    target = min(int(target_tile_bytes), max(usable // 8, 1 << 20))
    return _fms_two_pass(x, weight, bias,
                         target_tile_bytes=target, vmem_limit=usable)


def fms_ref(x, weight, bias):
    """Pure-JAX reference mirroring the PyTorch forward."""
    s = jnp.mean(x, axis=-1)                 # (B, C)
    s = s @ weight.T + bias                  # (B, C)
    s = jax.nn.sigmoid(s)[:, :, None]        # (B, C, 1)
    return x * s + s


if __name__ == "__main__":
    key = jax.random.PRNGKey(0)
    k_x, k_w, k_b, k_x2 = jax.random.split(key, 4)

    B, C, T = 2, 16, 32          # batch, filter_length (channels), time
    x = jax.random.normal(k_x, (B, C, T), dtype=jnp.float32)

    # Deterministic parameter init (mimics nn.Linear's uniform(-1/sqrt(C), 1/sqrt(C)))
    bound = 1.0 / (C ** 0.5)
    weight = jax.random.uniform(k_w, (C, C), minval=-bound, maxval=bound,
                                dtype=jnp.float32)
    bias = jax.random.uniform(k_b, (C,), minval=-bound, maxval=bound,
                              dtype=jnp.float32)

    # Small shape -> fused single-pass path (grid over batch rows).
    out = jax.block_until_ready(fms(x, weight, bias))
    ref = fms_ref(x, weight, bias)
    assert out.shape == (B, C, T)
    assert jnp.allclose(out, ref, atol=1e-5, rtol=1e-5), "fused path mismatch"

    # Force the streaming two-pass path with a tiny tile budget and a T that is
    # not a multiple of 128, exercising (B*C)-row tiling and tail masking.
    T2 = 500
    x2 = jax.random.normal(k_x2, (B, C, T2), dtype=jnp.float32)
    out2 = jax.block_until_ready(
        fms(x2, weight, bias, force_two_pass=True, target_tile_bytes=16 * 1024))
    ref2 = fms_ref(x2, weight, bias)
    assert out2.shape == (B, C, T2)
    assert jnp.allclose(out2, ref2, atol=1e-5, rtol=1e-5), "two-pass mismatch"

    print("KERNEL_OK")
</pallas_src>

<mosaic_0001>
module attributes {stable_mosaic.version = 11 : i64} {
  func.func @_fms_fused_kernel(%arg0: i32, %arg1: memref<1x16x32xf32, #tpu.memory_space<vmem>>, %arg2: memref<16x16xf32, #tpu.memory_space<vmem>>, %arg3: memref<16x1xf32, #tpu.memory_space<vmem>>, %arg4: memref<1x16x32xf32, #tpu.memory_space<vmem>>) attributes {dimension_semantics = [#tpu.dimension_semantics<parallel>], iteration_bounds = array<i64: 2>, scalar_prefetch = 0 : i64, scratch_operands = 0 : i64, tpu.core_type = #tpu.core_type<tc>, window_params = [{transform_indices = @transform_0, window_bounds = array<i64: 1, 16, 32>}, {pipeline_mode = #tpu.pipeline_mode<synchronous>, transform_indices = @transform_1, window_bounds = array<i64: 16, 16>}, {pipeline_mode = #tpu.pipeline_mode<synchronous>, transform_indices = @transform_2, window_bounds = array<i64: 16, 1>}, {transform_indices = @transform_3, window_bounds = array<i64: 1, 16, 32>}]} {
    %c0 = arith.constant 0 : index
    %c0_0 = arith.constant 0 : index
    %c0_1 = arith.constant 0 : index
    %0 = vector.load %arg1[%c0, %c0_0, %c0_1] : memref<1x16x32xf32, #tpu.memory_space<vmem>>, vector<1x16x32xf32>
    %1 = vector.shape_cast %0 : vector<1x16x32xf32> to vector<16x32xf32>
    %cst = arith.constant dense<0.000000e+00> : vector<16xf32>
    %2 = vector.multi_reduction <add>, %1, %cst [1] : vector<16x32xf32> to vector<16xf32>
    %3 = vector.shape_cast %2 : vector<16xf32> to vector<16x1xf32>
    %cst_2 = arith.constant 3.125000e-02 : f32
    %4 = vector.broadcast %cst_2 : f32 to vector<16x1xf32>
    %5 = arith.mulf %3, %4 : vector<16x1xf32>
    %c0_3 = arith.constant 0 : index
    %c0_4 = arith.constant 0 : index
    %6 = vector.load %arg2[%c0_3, %c0_4] : memref<16x16xf32, #tpu.memory_space<vmem>>, vector<16x16xf32>
    %cst_5 = arith.constant dense<0.000000e+00> : vector<16x1xf32>
    %7 = tpu.matmul %6, %5, %cst_5 {dimension_numbers = #tpu.dot_dimension_numbers<[1], [0], [0], [1], [0, 0, 1, 1], [], []>} : vector<16x16xf32>, vector<16x1xf32>, vector<16x1xf32> -> vector<16x1xf32>
    %c0_6 = arith.constant 0 : index
    %c0_7 = arith.constant 0 : index
    %8 = vector.load %arg3[%c0_6, %c0_7] : memref<16x1xf32, #tpu.memory_space<vmem>>, vector<16x1xf32>
    %9 = arith.addf %7, %8 : vector<16x1xf32>
    %10 = arith.negf %9 : vector<16x1xf32>
    %11 = math.exp %10 : vector<16x1xf32>
    %cst_8 = arith.constant 1.000000e+00 : f32
    %12 = vector.broadcast %cst_8 : f32 to vector<16x1xf32>
    %13 = arith.addf %12, %11 : vector<16x1xf32>
    %14 = arith.divf %12, %13 : vector<16x1xf32>
    %15 = vector.broadcast %14 : vector<16x1xf32> to vector<16x32xf32>
    %16 = arith.mulf %1, %15 : vector<16x32xf32>
    %17 = vector.broadcast %14 : vector<16x1xf32> to vector<16x32xf32>
    %18 = arith.addf %16, %17 : vector<16x32xf32>
    %c0_9 = arith.constant 0 : index
    %c0_10 = arith.constant 0 : index
    %c0_11 = arith.constant 0 : index
    %19 = vector.load %arg4[%c0_9, %c0_10, %c0_11] : memref<1x16x32xf32, #tpu.memory_space<vmem>>, vector<1x16x32xf32>
    %20 = vector.shape_cast %19 : vector<1x16x32xf32> to vector<16x32xf32>
    %21 = vector.shape_cast %18 : vector<16x32xf32> to vector<1x16x32xf32>
    tpu.vector_store %arg4[%c0_9, %c0_10, %c0_11], %21 {strides = array<i32>} : memref<1x16x32xf32, #tpu.memory_space<vmem>>, vector<1x16x32xf32>,
    return
  }
  func.func @transform_0(%arg0: i32) -> (i32, i32, i32) {
    %c0_i32 = arith.constant 0 : i32
    %c0_i32_0 = arith.constant 0 : i32
    %c0_i32_1 = arith.constant 0 : i32
    return %arg0, %c0_i32, %c0_i32_0 : i32, i32, i32
  }
  func.func @transform_1(%arg0: i32) -> (i32, i32) {
    %c0_i32 = arith.constant 0 : i32
    %c0_i32_0 = arith.constant 0 : i32
    %c0_i32_1 = arith.constant 0 : i32
    return %c0_i32, %c0_i32_0 : i32, i32
  }
  func.func @transform_2(%arg0: i32) -> (i32, i32) {
    %c0_i32 = arith.constant 0 : i32
    %c0_i32_0 = arith.constant 0 : i32
    %c0_i32_1 = arith.constant 0 : i32
    return %c0_i32, %c0_i32_0 : i32, i32
  }
  func.func @transform_3(%arg0: i32) -> (i32, i32, i32) {
    %c0_i32 = arith.constant 0 : i32
    %c0_i32_0 = arith.constant 0 : i32
    %c0_i32_1 = arith.constant 0 : i32
    return %arg0, %c0_i32, %c0_i32_0 : i32, i32, i32
  }
}

</mosaic_0001>

<llo_original>
// kernel: tpu_custom_call.1
$region0: #{tpu_custom_call.1}
  #allocation0 [shape = 'u32[]', space=smem, size = 0x4, offset = 0x4, fixed_abs, tag = 'smem constant byte address 0x4 - core index']
  #allocation1 [shape = 'u32[144,128]{1,0:T(1,128)}', space=vmem, size = 0x12000, scoped, tag = 'internal scratch']
  %s0 = inlined_call_operand.hbm [shape: f32[2,16,32], index: 0, kind: input, shape index: {}]
  %s1 = inlined_call_operand.vmem [shape: f32[16,16], index: 1, kind: input, shape index: {}]
  %s2 = inlined_call_operand.vmem [shape: f32[16,1], index: 2, kind: input, shape index: {}]
  %s3 = inlined_call_operand.hbm [shape: f32[2,16,32], index: 3, kind: output, shape index: {}]
  %s4 = sld [smem:[#allocation0]]
  $region49: #{tpu_custom_call.1} parent=0
    _
  %s6 = ssub.s32 1, %s4
  %s7 = scalar_select 0, %s6, %s4
  $region1: #{tpu_custom_call.1} parent=0
    #allocation2 [shape = 'u8[16384]{0}', space=vmem, size = 0x4000, scoped, tag = 'input window, operand 0']
    #allocation3 [shape = 's32[2]{0}', space=sflag, size = 0x8, scoped, tag = 'scoped memory for tpu_custom_call.1']
    #allocation4 [shape = 's32[2]{0}', space=sflag, size = 0x8, scoped, tag = 'scoped memory for tpu_custom_call.1']
    #allocation5 [shape = 'u8[16384]{0}', space=vmem, size = 0x4000, scoped, tag = 'output window, operand 0']
    %8 = vsyncpa [#allocation3], 0
    %s9 = scalar_lea.sflag [#allocation3], 1
    %10 = vsyncpa %s9, 0
    %11 = vsyncpa [#allocation4], 0
    %s12 = scalar_lea.sflag [#allocation4], 1
    %13 = vsyncpa %s12, 0
    loop: start=0, step=1, limit=4
    $region2: #{tpu_custom_call.1} parent=1 // loop_pre_header
      _
    $region3: #{tpu_custom_call.1} parent=1 // loop_header
      %s15 = sphi 0, %s19
      %p16 = scmp.ge.s32.totalorder %s15, 4
      %s25 = sphi 0, %s27
      %s28 = sphi 0, %s25
      %s29 = sphi 0, %s28
      %s45 = sphi 0, %s29
      %s49 = sphi 0, %s49
      %s51 = sphi 0, %s49
      %s52 = sphi 0, %s51
      %s66 = sphi 0, %s52
      %s70 = sphi 0, %s70
      %s72 = sphi 0, %s70
      %s73 = sphi 0, %s72
      %s87 = sphi 0, %s73
      %s93 = sphi 0, %s95
      %s96 = sphi 0, %s93
      %s97 = sphi 0, %s96
      %s113 = sphi 0, %s97
    $region4: #{tpu_custom_call.1} parent=1 // loop_header_branch
      %18 = sbr.rel (%p16) target = $region8
    $region5: #{tpu_custom_call.1} parent=1 // loop_body
      %s20 = ssub.s32 %s15, 1
      %s21 = ssub.s32 %s15, 2
      %s22 = sadd.s32 %s15, 1
      %s23 = ssub.s32 %s15, %s22
      %p24 = scmp.eq.s32.totalorder %s23, 0
      %s26 = sadd.s32 %s25, 1
      %s27 = scalar_select %p24, %s25, %s26
      %p30 = pneg %p24
      %p31 = scmp.eq.s32.totalorder %s15, 1
      %p32 = por %p30, %p31
      %p33 = scmp.ne.s32.totalorder %s25, %s28
      %p34 = scmp.eq.s32.totalorder %s15, 0
      %p35 = por %p33, %p34
      %p36 = scmp.ne.s32.totalorder %s25, %s28
      %p37 = scmp.eq.s32.totalorder %s20, 1
      %p38 = por %p36, %p37
      %p39 = scmp.ne.s32.totalorder %s28, %s29
      %p40 = scmp.eq.s32.totalorder %s20, 0
      %p41 = por %p39, %p40
      %p42 = scmp.ne.s32.totalorder %s28, %s29
      %p43 = scmp.eq.s32.totalorder %s21, 1
      %p44 = por %p42, %p43
      %p46 = scmp.ne.s32.totalorder %s29, %s45
      %p47 = scmp.eq.s32.totalorder %s21, 0
      %p48 = por %p46, %p47
      %s50 = sadd.s32 %s49, 1
      %p53 = scmp.eq.s32.totalorder %s15, 1
      %p54 = scmp.ne.s32.totalorder %s49, %s51
      %p55 = scmp.eq.s32.totalorder %s15, 0
      %p56 = por %p54, %p55
      %p57 = scmp.ne.s32.totalorder %s49, %s51
      %p58 = scmp.eq.s32.totalorder %s20, 1
      %p59 = por %p57, %p58
      %p60 = scmp.ne.s32.totalorder %s51, %s52
      %p61 = scmp.eq.s32.totalorder %s20, 0
      %p62 = por %p60, %p61
      %p63 = scmp.ne.s32.totalorder %s51, %s52
      %p64 = scmp.eq.s32.totalorder %s21, 1
      %p65 = por %p63, %p64
      %p67 = scmp.ne.s32.totalorder %s52, %s66
      %p68 = scmp.eq.s32.totalorder %s21, 0
      %p69 = por %p67, %p68
      %s71 = sadd.s32 %s70, 1
      %p74 = scmp.eq.s32.totalorder %s15, 1
      %p75 = scmp.ne.s32.totalorder %s70, %s72
      %p76 = scmp.eq.s32.totalorder %s15, 0
      %p77 = por %p75, %p76
      %p78 = scmp.ne.s32.totalorder %s70, %s72
      %p79 = scmp.eq.s32.totalorder %s20, 1
      %p80 = por %p78, %p79
      %p81 = scmp.ne.s32.totalorder %s72, %s73
      %p82 = scmp.eq.s32.totalorder %s20, 0
      %p83 = por %p81, %p82
      %p84 = scmp.ne.s32.totalorder %s72, %s73
      %p85 = scmp.eq.s32.totalorder %s21, 1
      %p86 = por %p84, %p85
      %p88 = scmp.ne.s32.totalorder %s73, %s87
      %p89 = scmp.eq.s32.totalorder %s21, 0
      %p90 = por %p88, %p89
      %s91 = ssub.s32 %s15, %s22
      %p92 = scmp.eq.s32.totalorder %s91, 0
      %s94 = sadd.s32 %s93, 1
      %s95 = scalar_select %p92, %s93, %s94
      %p98 = pneg %p92
      %p99 = scmp.eq.s32.totalorder %s15, 1
      %p100 = por %p98, %p99
      %p101 = scmp.ne.s32.totalorder %s93, %s96
      %p102 = scmp.eq.s32.totalorder %s15, 0
      %p103 = por %p101, %p102
      %p104 = scmp.ne.s32.totalorder %s93, %s96
      %p105 = scmp.eq.s32.totalorder %s20, 1
      %p106 = por %p104, %p105
      %p107 = scmp.ne.s32.totalorder %s96, %s97
      %p108 = scmp.eq.s32.totalorder %s20, 0
      %p109 = por %p107, %p108
      %p110 = scmp.ne.s32.totalorder %s96, %s97
      %p111 = scmp.eq.s32.totalorder %s21, 1
      %p112 = por %p110, %p111
      %p114 = scmp.ne.s32.totalorder %s97, %s113
      %p115 = scmp.eq.s32.totalorder %s21, 0
      %p116 = por %p114, %p115
      %p117 = scmp.le.s32.totalorder 1, %s15
      %p118 = scmp.lt.s32.totalorder %s15, 3
      %p119 = pnand %p117, %p118
      %p120 = pneg %p119
      // Predicated region
      $region9: #{tpu_custom_call.1} parent=5 // pred_check
        _
      $region10: #{tpu_custom_call.1} parent=5 // pred_check_branch
        %122 = sbr.rel (%p119) target = $region12
      $region11: #{tpu_custom_call.1} parent=5 // pred_region
        %s123 = ssub.s32 %s15, 1
        // Predicated region
        $region13: #{tpu_custom_call.1} parent=11 // pred_check
          %p124 = pneg %p62
        $region14: #{tpu_custom_call.1} parent=11 // pred_check_branch
          %126 = sbr.rel (%p124) target = $region16
        $region15: #{tpu_custom_call.1} parent=11 // pred_region
          _
        $region16: #{tpu_custom_call.1} parent=11 // pred_fallthru
          _
        // Predicated region
        $region17: #{tpu_custom_call.1} parent=11 // pred_check
          %p127 = pneg %p83
        $region18: #{tpu_custom_call.1} parent=11 // pred_check_branch
          %129 = sbr.rel (%p127) target = $region20
        $region19: #{tpu_custom_call.1} parent=11 // pred_region
          _
        $region20: #{tpu_custom_call.1} parent=11 // pred_fallthru
          _
      $region12: #{tpu_custom_call.1} parent=5 // pred_fallthru
        _
      %p130 = scmp.lt.s32.totalorder %s15, 2
      // Predicated region
      $region21: #{tpu_custom_call.1} parent=5 // pred_check
        %p131 = pneg %p130
      $region22: #{tpu_custom_call.1} parent=5 // pred_check_branch
        %133 = sbr.rel (%p131) target = $region24
      $region23: #{tpu_custom_call.1} parent=5 // pred_region
        // Predicated region
        $region25: #{tpu_custom_call.1} parent=23 // pred_check
          %p134 = pneg %p35
        $region26: #{tpu_custom_call.1} parent=23 // pred_check_branch
          %136 = sbr.rel (%p134) target = $region28
        $region27: #{tpu_custom_call.1} parent=23 // pred_region
          %s137 = sand.u32 %s25, 1
          %s138 = scalar_lea.sflag [#allocation3], %s137
          %s139 = sand.u32 %s25, 1
          %s140 = smul.addr %s139, 16
          %s141 = scalar_lea.vmem [#allocation2], %s140
          %s143 = ssub.s32 256, 256
          %144 = vsyncadd %s138, %s143
          %s145 = smul.addr %s15, 2
          %s146 = smul.addr %s145, 128
          %s147 = scalar_lea.hbm %s0, %s146
          %s148 = sshll.u32 %s141, 4
          %s149 = int_to_ptr.vmem [resolvable:$true] %s148
          %154 = dma.hbm_to_vmem [thread:$0]  %s147, 256, %s149, %s138, 128, 128, 8
        $region28: #{tpu_custom_call.1} parent=23 // pred_fallthru
          _
      $region24: #{tpu_custom_call.1} parent=5 // pred_fallthru
        _
      %p155 = scmp.le.s32.totalorder 1, %s15
      %p156 = scmp.lt.s32.totalorder %s15, 3
      %p157 = pnand %p155, %p156
      %p158 = pneg %p157
      // Predicated region
      $region29: #{tpu_custom_call.1} parent=5 // pred_check
        _
      $region30: #{tpu_custom_call.1} parent=5 // pred_check_branch
        %160 = sbr.rel (%p157) target = $region32
      $region31: #{tpu_custom_call.1} parent=5 // pred_region
        %s161 = ssub.s32 %s15, 1
        %s162 = sand.u32 %s28, 1
        %s163 = scalar_lea.sflag [#allocation3], %s162
        %s164 = sand.u32 %s28, 1
        %s165 = smul.addr %s164, 16
        %s166 = scalar_lea.vmem [#allocation2], %s165
        // Predicated region
        $region33: #{tpu_custom_call.1} parent=31 // pred_check
          %p167 = pneg %p41
        $region34: #{tpu_custom_call.1} parent=31 // pred_check_branch
          %169 = sbr.rel (%p167) target = $region36
        $region35: #{tpu_custom_call.1} parent=31 // pred_region
          %170 = dma.done %s163, 256
        $region36: #{tpu_custom_call.1} parent=31 // pred_fallthru
          _
        %s171 = sand.u32 %s28, 1
        %s172 = scalar_lea.sflag [#allocation3], %s171
        %s173 = sand.u32 %s28, 1
        %s174 = smul.addr %s173, 16
        %s175 = scalar_lea.vmem [#allocation2], %s174
        %p176 = pneg %p41
        %p177 = pneg %p38
        %p178 = pneg %p62
        %p179 = pneg %p59
        %p180 = pneg %p83
        %p181 = pneg %p80
        %p182 = pneg %p109
        %p183 = pneg %p106
        %s184 = sand.u32 %s96, 1
        %s185 = scalar_lea.sflag [#allocation4], %s184
        %s186 = sand.u32 %s96, 1
        %s187 = smul.addr %s186, 16
        %s188 = scalar_lea.vmem [#allocation5], %s187
        %v189 = vld [vmem:[%s166] sm:$0xff]
        %v190 = vld [vmem:[%s166 + $0x8] sm:$0xff]
        %vm191 = vcmask 261120
        %v192 = vsel %vm191, %v189, 0.0
        %193 = vadd.xlane.f32.xlu0 %v192
        %v194 = vpop.xlane.xlu0 %193
        %v195 = vsel %vm191, %v190, 0.0
        %196 = vadd.xlane.f32.xlu0 %v195
        %v197 = vpop.xlane.xlu0 %196
        %v198 = vmul.f32 %v194, 0.03125
        %v199 = vmul.f32 %v197, 0.03125
        %v200 = vld [vmem:[%s1] sm:$0xff]
        %v201 = vld [vmem:[%s1 + $0x8] sm:$0xff]
        %v202 = vld [vmem:[%s2] sm:$0xff]
        %v203 = vld [vmem:[%s2 + $0x8] sm:$0xff]
        %vm204 = vcmask 130048
        %v206 = vsel %vm204, %v200, 0
        %v209 = vsel %vm204, %v201, 0
        %211 = vmatprep.subr.mxu0 0.0
        %212 = vmatpush1.msra.mxu0 %v198
        %213 = vmatprep.subr.mxu0 0.0
        %214 = vmatpush1.msra.mxu0 %v199
        %215 = vmatprep.subr.mxu0 0.0
        %216 = vmatpush1.msra.mxu0 0.0
        %217 = vmatprep.subr.mxu0 0.0
        %218 = vmatpush1.msra.mxu0 0.0
        %219 = vmatprep.subr.mxu0 0.0
        %220 = vmatpush1.msra.mxu0 0.0
        %221 = vmatprep.subr.mxu0 0.0
        %222 = vmatpush1.msra.mxu0 0.0
        %223 = vmatprep.subr.mxu0 0.0
        %224 = vmatpush1.msra.mxu0 0.0
        %225 = vmatprep.subr.mxu0 0.0
        %226 = vmatpush1.msra.mxu0 0.0
        %227 = vmatprep.subr.mxu0 0.0
        %228 = vmatpush1.msra.mxu0 0.0
        %229 = vmatprep.subr.mxu0 0.0
        %230 = vmatpush1.msra.mxu0 0.0
        %231 = vmatprep.subr.mxu0 0.0
        %232 = vmatpush1.msra.mxu0 0.0
        %233 = vmatprep.subr.mxu0 0.0
        %234 = vmatpush1.msra.mxu0 0.0
        %235 = vmatprep.subr.mxu0 0.0
        %236 = vmatpush1.msra.mxu0 0.0
        %237 = vmatprep.subr.mxu0 0.0
        %238 = vmatpush1.msra.mxu0 0.0
        %239 = vmatprep.subr.mxu0 0.0
        %240 = vmatpush1.msra.mxu0 0.0
        %241 = vmatprep.subr.mxu0 0.0
        %242 = vmatpush1.msra.mxu0 0.0
        %243 = vmatprep.subr.mxu0 0.0
        %244 = vmatpush1.msra.mxu0 0.0
        %245 = vmatprep.subr.mxu0 0.0
        %246 = vmatpush1.msra.mxu0 0.0
        %247 = vmatprep.subr.mxu0 0.0
        %248 = vmatpush1.msra.mxu0 0.0
        %249 = vmatprep.subr.mxu0 0.0
        %250 = vmatpush1.msra.mxu0 0.0
        %251 = vmatprep.subr.mxu0 0.0
        %252 = vmatpush1.msra.mxu0 0.0
        %253 = vmatprep.subr.mxu0 0.0
        %254 = vmatpush1.msra.mxu0 0.0
        %255 = vmatprep.subr.mxu0 0.0
        %256 = vmatpush1.msra.mxu0 0.0
        %257 = vmatprep.subr.mxu0 0.0
        %258 = vmatpush1.msra.mxu0 0.0
        %259 = vmatprep.subr.mxu0 0.0
        %260 = vmatpush1.msra.mxu0 0.0
        %261 = vmatprep.subr.mxu0 0.0
        %262 = vmatpush1.msra.mxu0 0.0
        %263 = vmatprep.subr.mxu0 0.0
        %264 = vmatpush1.msra.mxu0 0.0
        %265 = vmatprep.subr.mxu0 0.0
        %266 = vmatpush1.msra.mxu0 0.0
        %267 = vmatprep.subr.mxu0 0.0
        %268 = vmatpush1.msra.mxu0 0.0
        %269 = vmatprep.subr.mxu0 0.0
        %270 = vmatpush1.msra.mxu0 0.0
        %271 = vmatprep.subr.mxu0 0.0
        %272 = vmatpush1.msra.mxu0 0.0
        %273 = vmatprep.subr.mxu0 0.0
        %274 = vmatpush1.msra.mxu0 0.0
        %275 = vmatprep.mubr.f32.mxu0 0.0
        %276 = vmatmul.mubr.f32.gmra.mrb[0].mxu0 %v206
        %v277 = vpop.f32.mrb[0].mxu0
        %v278 = vadd.f32 %v202, %v277
        %v279 = vpop.f32.mrb[0].mxu0
        %280 = vmatprep.mubr.f32.mxu0 0.0
        %281 = vmatmul.mubr.f32.gmra.mrb[0].mxu0 %v209
        %v282 = vpop.f32.mrb[0].mxu0
        %v283 = vadd.f32 %v203, %v282
        %v284 = vpop.f32.mrb[0].mxu0
        %285 = vdwg.mxu0
        %v286 = vxor.u32 %v278, 2147483648
        %v287 = vxor.u32 %v283, 2147483648
        %v288 = vmul.f32 %v286, 1.442695
        %v289 = vpow.pop %v288
        %v290 = vmul.f32 %v287, 1.442695
        %v291 = vpow.pop %v290
        %v292 = vadd.f32 %v289, 1.0
        %v293 = vadd.f32 %v291, 1.0
        %v294 = vrcp.pop %v292
        %v295 = vmul.f32 1.0, %v294
        %v296 = vrcp.pop %v293
        %v297 = vmul.f32 1.0, %v296
        %299 = vset.pattern.permute.xlu0 0
        %300 = vperm.xlu0 %299, %v295
        %v301 = vpop.permute.xlu0 %300
        %304 = vset.pattern.permute.xlu0 0
        %305 = vperm.xlu0 %304, %v297
        %v306 = vpop.permute.xlu0 %305
        %v308 = vmul.f32 %v189, %v301
        %v309 = vmul.f32 %v190, %v306
        %v310 = vadd.f32 %v308, %v301
        %v311 = vadd.f32 %v309, %v306
        %312 = vst.msk [vmem:[%s188] sm:$0xff] %vm191, %v310
        %313 = vst.msk [vmem:[%s188 + $0x8] sm:$0xff] %vm191, %v311
        %s314 = sand.u32 %s96, 1
        %s315 = scalar_lea.sflag [#allocation4], %s314
        %s316 = sand.u32 %s96, 1
        %s317 = smul.addr %s316, 16
        %s318 = scalar_lea.vmem [#allocation5], %s317
        // Predicated region
        $region37: #{tpu_custom_call.1} parent=31 // pred_check
          %p319 = pneg %p106
        $region38: #{tpu_custom_call.1} parent=31 // pred_check_branch
          %321 = sbr.rel (%p319) target = $region40
        $region39: #{tpu_custom_call.1} parent=31 // pred_region
          %s323 = ssub.s32 256, 256
          %324 = vsyncadd %s315, %s323
          %s325 = smul.addr %s20, 2
          %s326 = smul.addr %s325, 128
          %s327 = scalar_lea.hbm %s3, %s326
          %s328 = sshll.u32 %s318, 4
          %s329 = int_to_ptr.vmem [resolvable:$true] %s328
          %334 = dma.vmem_to_hbm [thread:$0]  %s329, 256, %s327, %s315, 128, 128, 8
        $region40: #{tpu_custom_call.1} parent=31 // pred_fallthru
          _
      $region32: #{tpu_custom_call.1} parent=5 // pred_fallthru
        _
      %p335 = scmp.le.s32.totalorder 2, %s15
      // Predicated region
      $region41: #{tpu_custom_call.1} parent=5 // pred_check
        %p336 = pneg %p335
      $region42: #{tpu_custom_call.1} parent=5 // pred_check_branch
        %338 = sbr.rel (%p336) target = $region44
      $region43: #{tpu_custom_call.1} parent=5 // pred_region
        %s339 = ssub.s32 %s15, 2
        // Predicated region
        $region45: #{tpu_custom_call.1} parent=43 // pred_check
          %p340 = pneg %p112
        $region46: #{tpu_custom_call.1} parent=43 // pred_check_branch
          %342 = sbr.rel (%p340) target = $region48
        $region47: #{tpu_custom_call.1} parent=43 // pred_region
          %s343 = sand.u32 %s97, 1
          %s344 = scalar_lea.sflag [#allocation4], %s343
          %s345 = sand.u32 %s97, 1
          %s346 = smul.addr %s345, 16
          %s347 = scalar_lea.vmem [#allocation5], %s346
          %348 = dma.done %s344, 256
        $region48: #{tpu_custom_call.1} parent=43 // pred_fallthru
          _
      $region44: #{tpu_custom_call.1} parent=5 // pred_fallthru
        _
    $region6: #{tpu_custom_call.1} parent=1 // loop_footer
      %s19 = sadd.s32 1, %s15
    $region7: #{tpu_custom_call.1} parent=1 // loop_footer_branch
      %14 = sbr.rel target = $region3
    $region8: #{tpu_custom_call.1} parent=1 // loop_exit
      _
    %349 = vsyncpa [#allocation3], 1
    %s350 = scalar_lea.sflag [#allocation3], 1
    %351 = vsyncpa %s350, 1
    %352 = vsyncpa [#allocation4], 1
    %s353 = scalar_lea.sflag [#allocation4], 1
    %354 = vsyncpa %s353, 1

</llo_original>
